<compile_context>
chip_gen: v5e
topology: v5e:2x2
jax: 0.10.0
libtpu: 0.0.40
codegen_flags: <defaults>
</compile_context>

<pallas_src>
from functools import partial

import jax
import jax.numpy as jnp
from jax import lax
from jax.experimental import pallas as pl
from jax.experimental.pallas import tpu as pltpu

_NEG_INF = jnp.float32(-10000000000.0)


def _mult_attn_kernel(q_ref, s_ref, amask_ref, w_ref, owt_ref, ob_ref,
                      *out_refs, return_attn_weights, use_bf16_ctx):
    if return_attn_weights:
        attn_w_ref, out_ref = out_refs
    else:
        (out_ref,) = out_refs
        attn_w_ref = None

    tb, lq, dq = q_ref.shape
    ds = s_ref.shape[2]
    dout = owt_ref.shape[1]

    s_blk = q_dtype_s = s_ref[...]                       # [tb, Ls, Ds] f32

    # q @ W as a single merged (tb*Lq, Dq) x (Dq, Ds) MXU matmul (f32 path so
    # attn_w stays accurate w.r.t. the reference).
    q2 = q_ref[...].reshape(tb * lq, dq)
    qw = jnp.dot(q2, w_ref[...], preferred_element_type=jnp.float32)
    qw = qw.reshape(tb, lq, ds)

    # score = qW @ s^T, contracting the last dims directly (no explicit .T).
    score = lax.dot_general(
        qw, s_blk,
        dimension_numbers=(((2,), (2,)), ((0,), (0,))),
        preferred_element_type=jnp.float32)              # [tb, Lq, Ls]

    # Additive mask precomputed in the wrapper: 0 = keep, -1e10 = drop.
    score = score + amask_ref[...]                       # [tb, 1, Ls] broadcasts

    # Numerically stable softmax over Ls.
    score_max = jnp.max(score, axis=-1, keepdims=True)
    e = jnp.exp(score - score_max)
    denom = jnp.sum(e, axis=-1, keepdims=True)
    # EUP approximate reciprocal seed + one Newton refinement (~f32 accuracy,
    # keeps the divide off the VALU).
    r = pl.reciprocal(denom, approx=True)
    r = r * (2.0 - denom * r)
    attn_w = e * r

    if attn_w_ref is not None:
        attn_w_ref[...] = attn_w.astype(attn_w_ref.dtype)

    # context = attn_w @ s (batched contraction over Ls), MXU-friendly bf16
    # operands with f32 accumulation.
    ctx_dtype = jnp.bfloat16 if use_bf16_ctx else jnp.float32
    ctx = lax.dot_general(
        attn_w.astype(ctx_dtype), s_blk.astype(ctx_dtype),
        dimension_numbers=(((2,), (1,)), ((0,), (0,))),
        preferred_element_type=jnp.float32)              # [tb, Lq, Ds]

    # Final linear with pre-transposed weight [Ds, Dout]: one merged matmul.
    out = jnp.dot(ctx.reshape(tb * lq, ds).astype(ctx_dtype), owt_ref[...],
                  preferred_element_type=jnp.float32)
    out = out + ob_ref[...]                              # [1, Dout] broadcasts
    out_ref[...] = out.reshape(tb, lq, dout).astype(out_ref.dtype)


def multiplicative_attention(q, s, mask, w, out_w, out_b, *,
                             return_attn_weights=True,
                             use_bf16_ctx=True,
                             vmem_budget_bytes=16 * 1024 * 1024,
                             max_block_b=256):
    """Luong multiplicative attention.

    q: [B, Lq, Dq], s: [B, Ls, Ds], mask: [B, 1, Ls],
    w: [Dq, Ds], out_w: [Dout, Ds], out_b: [Dout].

    Returns (attn_w [B, Lq, Ls], attn_out [B, Lq, Dout]) when
    return_attn_weights, else attn_out only.

    vmem_budget_bytes sizes the batch block (tb) AND vmem_limit_bytes.  The
    default (16 MiB) is safe on v7x (64 MiB VMEM/TC); on v5e/v6e (128 MiB) it
    can be raised to 32-48 MiB to amortize per-grid-step overhead further.
    """
    B, Lq, Dq = q.shape
    _, Ls, Ds = s.shape
    Dout = out_w.shape[0]
    f32 = jnp.float32
    w_itemsize = 2 if use_bf16_ctx else 4

    # Additive mask (tiny): 0 = keep, -1e10 = drop.
    amask = jnp.where(mask == 0, _NEG_INF, f32(0.0)).astype(f32)   # [B,1,Ls]

    # Parameters: score weight stays f32; output projection pre-transposed
    # once (and cast to bf16 when the bf16 ctx path is enabled).
    w32 = w.astype(f32)
    owt = out_w.T.astype(jnp.bfloat16 if use_bf16_ctx else f32)    # [Ds, Dout]
    ob = out_b.astype(f32).reshape(1, Dout)

    # Batch rows per grid step from one VMEM budget (double-buffered blocks +
    # shared weight blocks + margin).
    per_b_bytes = 4 * (Lq * Dq + Ls * Ds + Ls + Lq * Dout
                       + (Lq * Ls if return_attn_weights else 0))
    shared_bytes = 4 * Dq * Ds + w_itemsize * Ds * Dout + 4 * Dout
    avail = max(vmem_budget_bytes - 2 * shared_bytes - (1 << 20),
                2 * per_b_bytes)
    tb = int(max(1, min(max_block_b, avail // (2 * per_b_bytes))))
    if B >= 2:
        # >= 2 grid steps so both v7x TensorCores get work ("parallel" axis);
        # harmless on single-TC v5e/v6e (one extra ~0.35us step).
        tb = min(tb, pl.cdiv(B, 2))
    tb = min(tb, B)
    grid_b = pl.cdiv(B, tb)
    B_p = grid_b * tb

    q_in = q.astype(f32)
    s_in = s.astype(f32)
    if B_p != B:   # pad ONLY the batch axis (cheap); rows sliced off afterwards
        pad = ((0, B_p - B), (0, 0), (0, 0))
        q_in = jnp.pad(q_in, pad)
        s_in = jnp.pad(s_in, pad)
        amask = jnp.pad(amask, pad)

    # Full-extent blocks on every non-batch axis (legal: block == array dims),
    # so no lane/sublane padding and no byte inflation.
    in_specs = (
        pl.BlockSpec((tb, Lq, Dq), lambda b: (b, 0, 0)),   # q
        pl.BlockSpec((tb, Ls, Ds), lambda b: (b, 0, 0)),   # s
        pl.BlockSpec((tb, 1, Ls), lambda b: (b, 0, 0)),    # additive mask
        pl.BlockSpec((Dq, Ds), lambda b: (0, 0)),          # W (shared)
        pl.BlockSpec((Ds, Dout), lambda b: (0, 0)),        # out_w^T (shared)
        pl.BlockSpec((1, Dout), lambda b: (0, 0)),         # out_b (shared)
    )

    out_specs = []
    out_shape = []
    if return_attn_weights:
        out_specs.append(pl.BlockSpec((tb, Lq, Ls), lambda b: (b, 0, 0)))
        out_shape.append(jax.ShapeDtypeStruct((B_p, Lq, Ls), f32))
    out_specs.append(pl.BlockSpec((tb, Lq, Dout), lambda b: (b, 0, 0)))
    out_shape.append(jax.ShapeDtypeStruct((B_p, Lq, Dout), f32))
    out_specs = tuple(out_specs)
    out_shape = tuple(out_shape)

    # Advisory cost estimate for XLA scheduling around the custom call.
    flops = 2 * B_p * Lq * (Dq * Ds + 2 * Ls * Ds + Ds * Dout)
    transcendentals = B_p * Lq * Ls
    bytes_accessed = (4 * B_p * (Lq * Dq + Ls * Ds + Ls)
                      + 4 * Dq * Ds + w_itemsize * Ds * Dout + 4 * Dout
                      + 4 * B_p * Lq * Dout
                      + (4 * B_p * Lq * Ls if return_attn_weights else 0))

    vmem_limit = int(max(32 << 20,
                         min(2 * vmem_budget_bytes + (8 << 20), 128 << 20)))

    results = pl.pallas_call(
        partial(_mult_attn_kernel,
                return_attn_weights=return_attn_weights,
                use_bf16_ctx=use_bf16_ctx),
        out_shape=out_shape,
        grid_spec=pltpu.PrefetchScalarGridSpec(
            num_scalar_prefetch=0,
            grid=(grid_b,),
            in_specs=in_specs,
            out_specs=out_specs,
        ),
        compiler_params=pltpu.CompilerParams(
            dimension_semantics=("parallel",),
            vmem_limit_bytes=vmem_limit,
        ),
        cost_estimate=pl.CostEstimate(
            flops=flops,
            transcendentals=transcendentals,
            bytes_accessed=bytes_accessed,
        ),
    )(q_in, s_in, amask, w32, owt, ob)

    if return_attn_weights:
        attn_w_p, attn_out_p = results
        return attn_w_p[:B], attn_out_p[:B]
    (attn_out_p,) = results
    return attn_out_p[:B]


def _reference(q, s, mask, w, out_w, out_b):
    score = jnp.einsum('bqi,ij,bsj->bqs', q, w, s)
    score = jnp.where(mask == 0, -10000000000.0, score)
    attn_w = jax.nn.softmax(score, axis=-1)
    attn_out = attn_w @ s
    attn_out = attn_out @ out_w.T + out_b
    return attn_w, attn_out


if __name__ == "__main__":
    key = jax.random.PRNGKey(0)
    k_q, k_s, k_w, k_ow, k_ob, k_m = jax.random.split(key, 6)

    # Module hyperparams (h_dim is unused by the PyTorch forward).
    B, Lq, Ls = 2, 8, 8
    q_dim, s_dim, h_dim, out_dim = 32, 32, 64, 16

    q = jax.random.normal(k_q, (B, Lq, q_dim), dtype=jnp.float32)
    s = jax.random.normal(k_s, (B, Ls, s_dim), dtype=jnp.float32)

    # mask: [B, 1, Ls], zeros mean "masked out"; keep at least one valid slot.
    mask = (jax.random.uniform(k_m, (B, 1, Ls)) > 0.3).astype(jnp.float32)
    mask = mask.at[:, :, 0].set(1.0)

    # Parameters (matching the nn.Module init shapes).
    w = jax.random.normal(k_w, (q_dim, s_dim), dtype=jnp.float32) * 0.001
    bound = 1.0 / (s_dim ** 0.5)
    out_w = jax.random.uniform(k_ow, (out_dim, s_dim), minval=-bound,
                               maxval=bound, dtype=jnp.float32)
    out_b = jax.random.uniform(k_ob, (out_dim,), minval=-bound, maxval=bound,
                               dtype=jnp.float32)

    attn_w, attn_out = multiplicative_attention(q, s, mask, w, out_w, out_b)
    jax.block_until_ready((attn_w, attn_out))

    ref_w, ref_out = _reference(q, s, mask, w, out_w, out_b)
    assert attn_w.shape == ref_w.shape and attn_out.shape == ref_out.shape
    # Score/softmax path is f32 -> tight tolerance on the weights.
    assert jnp.allclose(attn_w, ref_w, atol=1e-4, rtol=1e-4)
    # Context / output-projection matmuls use bf16 MXU operands (f32 acc).
    assert jnp.allclose(attn_out, ref_out, atol=2e-2, rtol=2e-2)

    print("KERNEL_OK")
</pallas_src>

<mosaic_0001>
module attributes {stable_mosaic.version = 11 : i64} {
  func.func @_mult_attn_kernel(%arg0: i32, %arg1: memref<1x8x32xf32, #tpu.memory_space<vmem>>, %arg2: memref<1x8x32xf32, #tpu.memory_space<vmem>>, %arg3: memref<1x1x8xf32, #tpu.memory_space<vmem>>, %arg4: memref<32x32xf32, #tpu.memory_space<vmem>>, %arg5: memref<32x16xbf16, #tpu.memory_space<vmem>>, %arg6: memref<1x16xf32, #tpu.memory_space<vmem>>, %arg7: memref<1x8x8xf32, #tpu.memory_space<vmem>>, %arg8: memref<1x8x16xf32, #tpu.memory_space<vmem>>) attributes {dimension_semantics = [#tpu.dimension_semantics<parallel>], iteration_bounds = array<i64: 2>, scalar_prefetch = 0 : i64, scratch_operands = 0 : i64, tpu.core_type = #tpu.core_type<tc>, window_params = [{transform_indices = @transform_0, window_bounds = array<i64: 1, 8, 32>}, {transform_indices = @transform_1, window_bounds = array<i64: 1, 8, 32>}, {transform_indices = @transform_2, window_bounds = array<i64: 1, 1, 8>}, {pipeline_mode = #tpu.pipeline_mode<synchronous>, transform_indices = @transform_3, window_bounds = array<i64: 32, 32>}, {pipeline_mode = #tpu.pipeline_mode<synchronous>, transform_indices = @transform_4, window_bounds = array<i64: 32, 16>}, {pipeline_mode = #tpu.pipeline_mode<synchronous>, transform_indices = @transform_5, window_bounds = array<i64: 1, 16>}, {transform_indices = @transform_6, window_bounds = array<i64: 1, 8, 8>}, {transform_indices = @transform_7, window_bounds = array<i64: 1, 8, 16>}]} {
    %c0 = arith.constant 0 : index
    %c0_0 = arith.constant 0 : index
    %c0_1 = arith.constant 0 : index
    %0 = vector.load %arg2[%c0, %c0_0, %c0_1] : memref<1x8x32xf32, #tpu.memory_space<vmem>>, vector<1x8x32xf32>
    %c0_2 = arith.constant 0 : index
    %c0_3 = arith.constant 0 : index
    %c0_4 = arith.constant 0 : index
    %1 = vector.load %arg1[%c0_2, %c0_3, %c0_4] : memref<1x8x32xf32, #tpu.memory_space<vmem>>, vector<1x8x32xf32>
    %2 = vector.shape_cast %1 : vector<1x8x32xf32> to vector<8x32xf32>
    %c0_5 = arith.constant 0 : index
    %c0_6 = arith.constant 0 : index
    %3 = vector.load %arg4[%c0_5, %c0_6] : memref<32x32xf32, #tpu.memory_space<vmem>>, vector<32x32xf32>
    %cst = arith.constant dense<0.000000e+00> : vector<8x32xf32>
    %4 = tpu.matmul %2, %3, %cst {dimension_numbers = #tpu.dot_dimension_numbers<[1], [0], [0], [1], [0, 0, 1, 1], [], []>} : vector<8x32xf32>, vector<32x32xf32>, vector<8x32xf32> -> vector<8x32xf32>
    %5 = vector.shape_cast %4 : vector<8x32xf32> to vector<1x8x32xf32>
    %cst_7 = arith.constant dense<0.000000e+00> : vector<1x8x8xf32>
    %6 = tpu.matmul %5, %0, %cst_7 {dimension_numbers = #tpu.dot_dimension_numbers<[2], [2], [1], [1], [0, 0, 0, 1, 1, 1], [0], [0]>} : vector<1x8x32xf32>, vector<1x8x32xf32>, vector<1x8x8xf32> -> vector<1x8x8xf32>
    %c0_8 = arith.constant 0 : index
    %c0_9 = arith.constant 0 : index
    %c0_10 = arith.constant 0 : index
    %7 = vector.load %arg3[%c0_8, %c0_9, %c0_10] : memref<1x1x8xf32, #tpu.memory_space<vmem>>, vector<1x1x8xf32>
    %8 = vector.broadcast %7 : vector<1x1x8xf32> to vector<1x8x8xf32>
    %9 = arith.addf %6, %8 : vector<1x8x8xf32>
    %cst_11 = arith.constant dense<0xFF800000> : vector<1x8xf32>
    %10 = vector.multi_reduction <maximumf>, %9, %cst_11 [2] : vector<1x8x8xf32> to vector<1x8xf32>
    %11 = vector.shape_cast %10 : vector<1x8xf32> to vector<1x8x1xf32>
    %12 = vector.broadcast %11 : vector<1x8x1xf32> to vector<1x8x8xf32>
    %13 = arith.subf %9, %12 : vector<1x8x8xf32>
    %14 = math.exp %13 : vector<1x8x8xf32>
    %cst_12 = arith.constant dense<0.000000e+00> : vector<1x8xf32>
    %15 = vector.multi_reduction <add>, %14, %cst_12 [2] : vector<1x8x8xf32> to vector<1x8xf32>
    %16 = vector.shape_cast %15 : vector<1x8xf32> to vector<1x8x1xf32>
    %17 = tpu.reciprocal %16 {approx = true} : vector<1x8x1xf32> -> vector<1x8x1xf32>
    %18 = arith.mulf %16, %17 : vector<1x8x1xf32>
    %cst_13 = arith.constant 2.000000e+00 : f32
    %19 = vector.broadcast %cst_13 : f32 to vector<1x8x1xf32>
    %20 = arith.subf %19, %18 : vector<1x8x1xf32>
    %21 = arith.mulf %17, %20 : vector<1x8x1xf32>
    %22 = vector.broadcast %21 : vector<1x8x1xf32> to vector<1x8x8xf32>
    %23 = arith.mulf %14, %22 : vector<1x8x8xf32>
    %c0_14 = arith.constant 0 : index
    %c0_15 = arith.constant 0 : index
    %c0_16 = arith.constant 0 : index
    %24 = vector.load %arg7[%c0_14, %c0_15, %c0_16] : memref<1x8x8xf32, #tpu.memory_space<vmem>>, vector<1x8x8xf32>
    tpu.vector_store %arg7[%c0_14, %c0_15, %c0_16], %23 {strides = array<i32>} : memref<1x8x8xf32, #tpu.memory_space<vmem>>, vector<1x8x8xf32>,
    %25 = arith.truncf %23 : vector<1x8x8xf32> to vector<1x8x8xbf16>
    %26 = arith.truncf %0 : vector<1x8x32xf32> to vector<1x8x32xbf16>
    %cst_17 = arith.constant dense<0.000000e+00> : vector<1x8x32xf32>
    %27 = tpu.matmul %25, %26, %cst_17 {dimension_numbers = #tpu.dot_dimension_numbers<[2], [1], [1], [2], [0, 0, 0, 1, 1, 2], [0], [0]>} : vector<1x8x8xbf16>, vector<1x8x32xbf16>, vector<1x8x32xf32> -> vector<1x8x32xf32>
    %28 = vector.shape_cast %27 : vector<1x8x32xf32> to vector<8x32xf32>
    %29 = arith.truncf %28 : vector<8x32xf32> to vector<8x32xbf16>
    %c0_18 = arith.constant 0 : index
    %c0_19 = arith.constant 0 : index
    %30 = vector.load %arg5[%c0_18, %c0_19] : memref<32x16xbf16, #tpu.memory_space<vmem>>, vector<32x16xbf16>
    %cst_20 = arith.constant dense<0.000000e+00> : vector<8x16xf32>
    %31 = tpu.matmul %29, %30, %cst_20 {dimension_numbers = #tpu.dot_dimension_numbers<[1], [0], [0], [1], [0, 0, 1, 1], [], []>} : vector<8x32xbf16>, vector<32x16xbf16>, vector<8x16xf32> -> vector<8x16xf32>
    %c0_21 = arith.constant 0 : index
    %c0_22 = arith.constant 0 : index
    %32 = vector.load %arg6[%c0_21, %c0_22] : memref<1x16xf32, #tpu.memory_space<vmem>>, vector<1x16xf32>
    %33 = vector.broadcast %32 : vector<1x16xf32> to vector<8x16xf32>
    %34 = arith.addf %31, %33 : vector<8x16xf32>
    %35 = vector.shape_cast %34 : vector<8x16xf32> to vector<1x8x16xf32>
    %c0_23 = arith.constant 0 : index
    %c0_24 = arith.constant 0 : index
    %c0_25 = arith.constant 0 : index
    %36 = vector.load %arg8[%c0_23, %c0_24, %c0_25] : memref<1x8x16xf32, #tpu.memory_space<vmem>>, vector<1x8x16xf32>
    tpu.vector_store %arg8[%c0_23, %c0_24, %c0_25], %35 {strides = array<i32>} : memref<1x8x16xf32, #tpu.memory_space<vmem>>, vector<1x8x16xf32>,
    return
  }
  func.func @transform_0(%arg0: i32) -> (i32, i32, i32) {
    %c0_i32 = arith.constant 0 : i32
    %c0_i32_0 = arith.constant 0 : i32
    %c0_i32_1 = arith.constant 0 : i32
    return %arg0, %c0_i32, %c0_i32_0 : i32, i32, i32
  }
  func.func @transform_1(%arg0: i32) -> (i32, i32, i32) {
    %c0_i32 = arith.constant 0 : i32
    %c0_i32_0 = arith.constant 0 : i32
    %c0_i32_1 = arith.constant 0 : i32
    return %arg0, %c0_i32, %c0_i32_0 : i32, i32, i32
  }
  func.func @transform_2(%arg0: i32) -> (i32, i32, i32) {
    %c0_i32 = arith.constant 0 : i32
    %c0_i32_0 = arith.constant 0 : i32
    %c0_i32_1 = arith.constant 0 : i32
    return %arg0, %c0_i32, %c0_i32_0 : i32, i32, i32
  }
  func.func @transform_3(%arg0: i32) -> (i32, i32) {
    %c0_i32 = arith.constant 0 : i32
    %c0_i32_0 = arith.constant 0 : i32
    %c0_i32_1 = arith.constant 0 : i32
    return %c0_i32, %c0_i32_0 : i32, i32
  }
  func.func @transform_4(%arg0: i32) -> (i32, i32) {
    %c0_i32 = arith.constant 0 : i32
    %c0_i32_0 = arith.constant 0 : i32
    %c0_i32_1 = arith.constant 0 : i32
    return %c0_i32, %c0_i32_0 : i32, i32
  }
  func.func @transform_5(%arg0: i32) -> (i32, i32) {
    %c0_i32 = arith.constant 0 : i32
    %c0_i32_0 = arith.constant 0 : i32
    %c0_i32_1 = arith.constant 0 : i32
    return %c0_i32, %c0_i32_0 : i32, i32
  }
  func.func @transform_6(%arg0: i32) -> (i32, i32, i32) {
    %c0_i32 = arith.constant 0 : i32
    %c0_i32_0 = arith.constant 0 : i32
    %c0_i32_1 = arith.constant 0 : i32
    return %arg0, %c0_i32, %c0_i32_0 : i32, i32, i32
  }
  func.func @transform_7(%arg0: i32) -> (i32, i32, i32) {
    %c0_i32 = arith.constant 0 : i32
    %c0_i32_0 = arith.constant 0 : i32
    %c0_i32_1 = arith.constant 0 : i32
    return %arg0, %c0_i32, %c0_i32_0 : i32, i32, i32
  }
}

</mosaic_0001>

<llo_original>
// kernel: tpu_custom_call.1
$region0: #{tpu_custom_call.1}
  #allocation0 [shape = 'u32[]', space=smem, size = 0x4, offset = 0x4, fixed_abs, tag = 'smem constant byte address 0x4 - core index']
  #allocation1 [shape = 'u32[72,128]{1,0:T(1,128)}', space=vmem, size = 0x9000, scoped, tag = 'internal scratch']
  %s0 = inlined_call_operand.vmem [shape: f32[2,8,32], index: 0, kind: input, shape index: {}]
  %s1 = inlined_call_operand.hbm [shape: f32[2,8,32], index: 1, kind: input, shape index: {}]
  %s2 = inlined_call_operand.vmem [shape: f32[2,1,8], index: 2, kind: input, shape index: {}]
  %s3 = inlined_call_operand.hbm [shape: f32[32,32], index: 3, kind: input, shape index: {}]
  %s4 = inlined_call_operand.vmem [shape: bf16[32,16], index: 4, kind: input, shape index: {}]
  %s5 = inlined_call_operand.vmem [shape: f32[1,16], index: 5, kind: input, shape index: {}]
  %s6 = inlined_call_operand.hbm [shape: f32[2,8,8], index: 6, kind: output, shape index: {0}]
  %s7 = inlined_call_operand.hbm [shape: f32[2,8,16], index: 7, kind: output, shape index: {1}]
  %8 = xla_tuple %s6, %s7
  %s9 = sld [smem:[#allocation0]]
  $region73: #{tpu_custom_call.1} parent=0
    _
  %s11 = ssub.s32 1, %s9
  %s12 = scalar_select 0, %s11, %s9
  $region1: #{tpu_custom_call.1} parent=0
    #allocation2 [shape = 'u8[8192]{0}', space=vmem, size = 0x2000, scoped, tag = 'input window, operand 1']
    #allocation3 [shape = 's32[2]{0}', space=sflag, size = 0x8, scoped, tag = 'scoped memory for tpu_custom_call.1']
    #allocation4 [shape = 's32[2]{0}', space=sflag, size = 0x8, scoped, tag = 'scoped memory for tpu_custom_call.1']
    #allocation5 [shape = 'u8[16384]{0}', space=vmem, size = 0x4000, scoped, tag = 'input window, operand 3, single buffered']
    #allocation6 [shape = 's32[1]{0}', space=sflag, size = 0x4, scoped, tag = 'scoped memory for tpu_custom_call.1']
    #allocation7 [shape = 'u8[8192]{0}', space=vmem, size = 0x2000, scoped, tag = 'output window, operand 0']
    #allocation8 [shape = 'u8[8192]{0}', space=vmem, size = 0x2000, scoped, tag = 'output window, operand 1']
    #allocation9 [shape = 's32[2]{0}', space=sflag, size = 0x8, scoped, tag = 'scoped memory for tpu_custom_call.1']
    %13 = vsyncpa [#allocation3], 0
    %s14 = scalar_lea.sflag [#allocation3], 1
    %15 = vsyncpa %s14, 0
    %16 = vsyncpa [#allocation6], 0
    %17 = vsyncpa [#allocation4], 0
    %s18 = scalar_lea.sflag [#allocation4], 1
    %19 = vsyncpa %s18, 0
    %20 = vsyncpa [#allocation9], 0
    %s21 = scalar_lea.sflag [#allocation9], 1
    %22 = vsyncpa %s21, 0
    loop: start=0, step=1, limit=4
    $region2: #{tpu_custom_call.1} parent=1 // loop_pre_header
      _
    $region3: #{tpu_custom_call.1} parent=1 // loop_header
      %s24 = sphi 0, %s28
      %p25 = scmp.ge.s32.totalorder %s24, 4
      %s34 = sphi 0, %s36
      %s37 = sphi 0, %s34
      %s38 = sphi 0, %s37
      %s54 = sphi 0, %s38
      %s60 = sphi 0, %s62
      %s63 = sphi 0, %s60
      %s64 = sphi 0, %s63
      %s80 = sphi 0, %s64
      %s86 = sphi 0, %s88
      %s89 = sphi 0, %s86
      %s90 = sphi 0, %s89
      %s106 = sphi 0, %s90
      %s110 = sphi 0, %s110
      %s112 = sphi 0, %s110
      %s113 = sphi 0, %s112
      %s127 = sphi 0, %s113
      %s131 = sphi 0, %s131
      %s133 = sphi 0, %s131
      %s134 = sphi 0, %s133
      %s148 = sphi 0, %s134
      %s152 = sphi 0, %s152
      %s154 = sphi 0, %s152
      %s155 = sphi 0, %s154
      %s169 = sphi 0, %s155
      %s175 = sphi 0, %s177
      %s178 = sphi 0, %s175
      %s179 = sphi 0, %s178
      %s195 = sphi 0, %s179
      %s201 = sphi 0, %s203
      %s204 = sphi 0, %s201
      %s205 = sphi 0, %s204
      %s221 = sphi 0, %s205
    $region4: #{tpu_custom_call.1} parent=1 // loop_header_branch
      %27 = sbr.rel (%p25) target = $region8
    $region5: #{tpu_custom_call.1} parent=1 // loop_body
      %s29 = ssub.s32 %s24, 1
      %s30 = ssub.s32 %s24, 2
      %s31 = sadd.s32 %s24, 1
      %s32 = ssub.s32 %s24, %s31
      %p33 = scmp.eq.s32.totalorder %s32, 0
      %s35 = sadd.s32 %s34, 1
      %s36 = scalar_select %p33, %s34, %s35
      %p39 = pneg %p33
      %p40 = scmp.eq.s32.totalorder %s24, 1
      %p41 = por %p39, %p40
      %p42 = scmp.ne.s32.totalorder %s34, %s37
      %p43 = scmp.eq.s32.totalorder %s24, 0
      %p44 = por %p42, %p43
      %p45 = scmp.ne.s32.totalorder %s34, %s37
      %p46 = scmp.eq.s32.totalorder %s29, 1
      %p47 = por %p45, %p46
      %p48 = scmp.ne.s32.totalorder %s37, %s38
      %p49 = scmp.eq.s32.totalorder %s29, 0
      %p50 = por %p48, %p49
      %p51 = scmp.ne.s32.totalorder %s37, %s38
      %p52 = scmp.eq.s32.totalorder %s30, 1
      %p53 = por %p51, %p52
      %p55 = scmp.ne.s32.totalorder %s38, %s54
      %p56 = scmp.eq.s32.totalorder %s30, 0
      %p57 = por %p55, %p56
      %s58 = ssub.s32 %s24, %s31
      %p59 = scmp.eq.s32.totalorder %s58, 0
      %s61 = sadd.s32 %s60, 1
      %s62 = scalar_select %p59, %s60, %s61
      %p65 = pneg %p59
      %p66 = scmp.eq.s32.totalorder %s24, 1
      %p67 = por %p65, %p66
      %p68 = scmp.ne.s32.totalorder %s60, %s63
      %p69 = scmp.eq.s32.totalorder %s24, 0
      %p70 = por %p68, %p69
      %p71 = scmp.ne.s32.totalorder %s60, %s63
      %p72 = scmp.eq.s32.totalorder %s29, 1
      %p73 = por %p71, %p72
      %p74 = scmp.ne.s32.totalorder %s63, %s64
      %p75 = scmp.eq.s32.totalorder %s29, 0
      %p76 = por %p74, %p75
      %p77 = scmp.ne.s32.totalorder %s63, %s64
      %p78 = scmp.eq.s32.totalorder %s30, 1
      %p79 = por %p77, %p78
      %p81 = scmp.ne.s32.totalorder %s64, %s80
      %p82 = scmp.eq.s32.totalorder %s30, 0
      %p83 = por %p81, %p82
      %s84 = ssub.s32 %s24, %s31
      %p85 = scmp.eq.s32.totalorder %s84, 0
      %s87 = sadd.s32 %s86, 1
      %s88 = scalar_select %p85, %s86, %s87
      %p91 = pneg %p85
      %p92 = scmp.eq.s32.totalorder %s24, 1
      %p93 = por %p91, %p92
      %p94 = scmp.ne.s32.totalorder %s86, %s89
      %p95 = scmp.eq.s32.totalorder %s24, 0
      %p96 = por %p94, %p95
      %p97 = scmp.ne.s32.totalorder %s86, %s89
      %p98 = scmp.eq.s32.totalorder %s29, 1
      %p99 = por %p97, %p98
      %p100 = scmp.ne.s32.totalorder %s89, %s90
      %p101 = scmp.eq.s32.totalorder %s29, 0
      %p102 = por %p100, %p101
      %p103 = scmp.ne.s32.totalorder %s89, %s90
      %p104 = scmp.eq.s32.totalorder %s30, 1
      %p105 = por %p103, %p104
      %p107 = scmp.ne.s32.totalorder %s90, %s106
      %p108 = scmp.eq.s32.totalorder %s30, 0
      %p109 = por %p107, %p108
      %s111 = sadd.s32 %s110, 1
      %p114 = scmp.eq.s32.totalorder %s24, 1
      %p115 = scmp.ne.s32.totalorder %s110, %s112
      %p116 = scmp.eq.s32.totalorder %s24, 0
      %p117 = por %p115, %p116
      %p118 = scmp.ne.s32.totalorder %s110, %s112
      %p119 = scmp.eq.s32.totalorder %s29, 1
      %p120 = por %p118, %p119
      %p121 = scmp.ne.s32.totalorder %s112, %s113
      %p122 = scmp.eq.s32.totalorder %s29, 0
      %p123 = por %p121, %p122
      %p124 = scmp.ne.s32.totalorder %s112, %s113
      %p125 = scmp.eq.s32.totalorder %s30, 1
      %p126 = por %p124, %p125
      %p128 = scmp.ne.s32.totalorder %s113, %s127
      %p129 = scmp.eq.s32.totalorder %s30, 0
      %p130 = por %p128, %p129
      %s132 = sadd.s32 %s131, 1
      %p135 = scmp.eq.s32.totalorder %s24, 1
      %p136 = scmp.ne.s32.totalorder %s131, %s133
      %p137 = scmp.eq.s32.totalorder %s24, 0
      %p138 = por %p136, %p137
      %p139 = scmp.ne.s32.totalorder %s131, %s133
      %p140 = scmp.eq.s32.totalorder %s29, 1
      %p141 = por %p139, %p140
      %p142 = scmp.ne.s32.totalorder %s133, %s134
      %p143 = scmp.eq.s32.totalorder %s29, 0
      %p144 = por %p142, %p143
      %p145 = scmp.ne.s32.totalorder %s133, %s134
      %p146 = scmp.eq.s32.totalorder %s30, 1
      %p147 = por %p145, %p146
      %p149 = scmp.ne.s32.totalorder %s134, %s148
      %p150 = scmp.eq.s32.totalorder %s30, 0
      %p151 = por %p149, %p150
      %s153 = sadd.s32 %s152, 1
      %p156 = scmp.eq.s32.totalorder %s24, 1
      %p157 = scmp.ne.s32.totalorder %s152, %s154
      %p158 = scmp.eq.s32.totalorder %s24, 0
      %p159 = por %p157, %p158
      %p160 = scmp.ne.s32.totalorder %s152, %s154
      %p161 = scmp.eq.s32.totalorder %s29, 1
      %p162 = por %p160, %p161
      %p163 = scmp.ne.s32.totalorder %s154, %s155
      %p164 = scmp.eq.s32.totalorder %s29, 0
      %p165 = por %p163, %p164
      %p166 = scmp.ne.s32.totalorder %s154, %s155
      %p167 = scmp.eq.s32.totalorder %s30, 1
      %p168 = por %p166, %p167
      %p170 = scmp.ne.s32.totalorder %s155, %s169
      %p171 = scmp.eq.s32.totalorder %s30, 0
      %p172 = por %p170, %p171
      %s173 = ssub.s32 %s24, %s31
      %p174 = scmp.eq.s32.totalorder %s173, 0
      %s176 = sadd.s32 %s175, 1
      %s177 = scalar_select %p174, %s175, %s176
      %p180 = pneg %p174
      %p181 = scmp.eq.s32.totalorder %s24, 1
      %p182 = por %p180, %p181
      %p183 = scmp.ne.s32.totalorder %s175, %s178
      %p184 = scmp.eq.s32.totalorder %s24, 0
      %p185 = por %p183, %p184
      %p186 = scmp.ne.s32.totalorder %s175, %s178
      %p187 = scmp.eq.s32.totalorder %s29, 1
      %p188 = por %p186, %p187
      %p189 = scmp.ne.s32.totalorder %s178, %s179
      %p190 = scmp.eq.s32.totalorder %s29, 0
      %p191 = por %p189, %p190
      %p192 = scmp.ne.s32.totalorder %s178, %s179
      %p193 = scmp.eq.s32.totalorder %s30, 1
      %p194 = por %p192, %p193
      %p196 = scmp.ne.s32.totalorder %s179, %s195
      %p197 = scmp.eq.s32.totalorder %s30, 0
      %p198 = por %p196, %p197
      %s199 = ssub.s32 %s24, %s31
      %p200 = scmp.eq.s32.totalorder %s199, 0
      %s202 = sadd.s32 %s201, 1
      %s203 = scalar_select %p200, %s201, %s202
      %p206 = pneg %p200
      %p207 = scmp.eq.s32.totalorder %s24, 1
      %p208 = por %p206, %p207
      %p209 = scmp.ne.s32.totalorder %s201, %s204
      %p210 = scmp.eq.s32.totalorder %s24, 0
      %p211 = por %p209, %p210
      %p212 = scmp.ne.s32.totalorder %s201, %s204
      %p213 = scmp.eq.s32.totalorder %s29, 1
      %p214 = por %p212, %p213
      %p215 = scmp.ne.s32.totalorder %s204, %s205
      %p216 = scmp.eq.s32.totalorder %s29, 0
      %p217 = por %p215, %p216
      %p218 = scmp.ne.s32.totalorder %s204, %s205
      %p219 = scmp.eq.s32.totalorder %s30, 1
      %p220 = por %p218, %p219
      %p222 = scmp.ne.s32.totalorder %s205, %s221
      %p223 = scmp.eq.s32.totalorder %s30, 0
      %p224 = por %p222, %p223
      %p225 = scmp.le.s32.totalorder 1, %s24
      %p226 = scmp.lt.s32.totalorder %s24, 3
      %p227 = pnand %p225, %p226
      %p228 = pneg %p227
      // Predicated region
      $region9: #{tpu_custom_call.1} parent=5 // pred_check
        _
      $region10: #{tpu_custom_call.1} parent=5 // pred_check_branch
        %230 = sbr.rel (%p227) target = $region12
      $region11: #{tpu_custom_call.1} parent=5 // pred_region
        %s231 = ssub.s32 %s24, 1
        // Predicated region
        $region13: #{tpu_custom_call.1} parent=11 // pred_check
          %p232 = pneg %p123
        $region14: #{tpu_custom_call.1} parent=11 // pred_check_branch
          %234 = sbr.rel (%p232) target = $region16
        $region15: #{tpu_custom_call.1} parent=11 // pred_region
          %236 = vsyncadd [#allocation6], 0
          %s237 = sshll.u32 %s3, 4
          %s238 = int_to_ptr.hbm [resolvable:$true] %s237
          %s239 = sshll.u32 [#allocation5], 4
          %s240 = int_to_ptr.vmem [resolvable:$true] %s239
          %245 = dma.hbm_to_vmem [thread:$0]  %s238, 512, %s240, [#allocation6], 128, 128, 8
        $region16: #{tpu_custom_call.1} parent=11 // pred_fallthru
          _
        // Predicated region
        $region17: #{tpu_custom_call.1} parent=11 // pred_check
          %p246 = pneg %p144
        $region18: #{tpu_custom_call.1} parent=11 // pred_check_branch
          %248 = sbr.rel (%p246) target = $region20
        $region19: #{tpu_custom_call.1} parent=11 // pred_region
          _
        $region20: #{tpu_custom_call.1} parent=11 // pred_fallthru
          _
        // Predicated region
        $region21: #{tpu_custom_call.1} parent=11 // pred_check
          %p249 = pneg %p165
        $region22: #{tpu_custom_call.1} parent=11 // pred_check_branch
          %251 = sbr.rel (%p249) target = $region24
        $region23: #{tpu_custom_call.1} parent=11 // pred_region
          _
        $region24: #{tpu_custom_call.1} parent=11 // pred_fallthru
          _
      $region12: #{tpu_custom_call.1} parent=5 // pred_fallthru
        _
      %p252 = scmp.lt.s32.totalorder %s24, 2
      // Predicated region
      $region25: #{tpu_custom_call.1} parent=5 // pred_check
        %p253 = pneg %p252
      $region26: #{tpu_custom_call.1} parent=5 // pred_check_branch
        %255 = sbr.rel (%p253) target = $region28
      $region27: #{tpu_custom_call.1} parent=5 // pred_region
        // Predicated region
        $region29: #{tpu_custom_call.1} parent=27 // pred_check
          %p256 = pneg %p44
        $region30: #{tpu_custom_call.1} parent=27 // pred_check_branch
          %258 = sbr.rel (%p256) target = $region32
        $region31: #{tpu_custom_call.1} parent=27 // pred_region
          %p259 = scmp.lt.s32.totalorder %s24, 1
          %s260 = scalar_select %p259, %s24, 1
          %s261 = smul.addr %s260, 8
          %s262 = scalar_lea.vmem %s0, %s261
        $region32: #{tpu_custom_call.1} parent=27 // pred_fallthru
          _
        // Predicated region
        $region33: #{tpu_custom_call.1} parent=27 // pred_check
          %p263 = pneg %p70
        $region34: #{tpu_custom_call.1} parent=27 // pred_check_branch
          %265 = sbr.rel (%p263) target = $region36
        $region35: #{tpu_custom_call.1} parent=27 // pred_region
          %s266 = sand.u32 %s60, 1
          %s267 = scalar_lea.sflag [#allocation3], %s266
          %s268 = sand.u32 %s60, 1
          %s269 = smul.addr %s268, 8
          %s270 = scalar_lea.vmem [#allocation2], %s269
          %272 = vsyncadd %s267, 0
          %s273 = smul.addr %s24, 8
          %s274 = scalar_lea.hbm %s1, %s273
          %s276 = sshll.u32 %s274, 4
          %s277 = int_to_ptr.hbm [resolvable:$true] %s276
          %s278 = sshll.u32 %s270, 4
          %s279 = int_to_ptr.vmem [resolvable:$true] %s278
          %281 = dma.hbm_to_vmem [thread:$0]  %s277, 128, %s279, %s267
        $region36: #{tpu_custom_call.1} parent=27 // pred_fallthru
          _
        // Predicated region
        $region37: #{tpu_custom_call.1} parent=27 // pred_check
          %p282 = pneg %p96
        $region38: #{tpu_custom_call.1} parent=27 // pred_check_branch
          %284 = sbr.rel (%p282) target = $region40
        $region39: #{tpu_custom_call.1} parent=27 // pred_region
          %p285 = scmp.lt.s32.totalorder %s24, 1
          %s286 = scalar_select %p285, %s24, 1
          %s287 = scalar_lea.vmem %s2, %s286
        $region40: #{tpu_custom_call.1} parent=27 // pred_fallthru
          _
      $region28: #{tpu_custom_call.1} parent=5 // pred_fallthru
        _
      %p288 = scmp.le.s32.totalorder 1, %s24
      %p289 = scmp.lt.s32.totalorder %s24, 3
      %p290 = pnand %p288, %p289
      %p291 = pneg %p290
      // Predicated region
      $region41: #{tpu_custom_call.1} parent=5 // pred_check
        _
      $region42: #{tpu_custom_call.1} parent=5 // pred_check_branch
        %293 = sbr.rel (%p290) target = $region44
      $region43: #{tpu_custom_call.1} parent=5 // pred_region
        %s294 = ssub.s32 %s24, 1
        %s295 = sand.u32 %s63, 1
        %s296 = scalar_lea.sflag [#allocation3], %s295
        %s297 = sand.u32 %s63, 1
        %s298 = smul.addr %s297, 8
        %s299 = scalar_lea.vmem [#allocation2], %s298
        // Predicated region
        $region45: #{tpu_custom_call.1} parent=43 // pred_check
          %p300 = pneg %p76
        $region46: #{tpu_custom_call.1} parent=43 // pred_check_branch
          %302 = sbr.rel (%p300) target = $region48
        $region47: #{tpu_custom_call.1} parent=43 // pred_region
          %304 = dma.done %s296, 128
        $region48: #{tpu_custom_call.1} parent=43 // pred_fallthru
          _
        // Predicated region
        $region49: #{tpu_custom_call.1} parent=43 // pred_check
          %p305 = pneg %p123
        $region50: #{tpu_custom_call.1} parent=43 // pred_check_branch
          %307 = sbr.rel (%p305) target = $region52
        $region51: #{tpu_custom_call.1} parent=43 // pred_region
          %309 = dma.done [#allocation6], 512
        $region52: #{tpu_custom_call.1} parent=43 // pred_fallthru
          _
        %p310 = scmp.lt.s32.totalorder %s29, 1
        %s311 = scalar_select %p310, %s29, 1
        %s312 = smul.addr %s311, 8
        %s313 = scalar_lea.vmem %s0, %s312
        %p314 = pneg %p50
        %p315 = pneg %p47
        %s316 = sand.u32 %s63, 1
        %s317 = scalar_lea.sflag [#allocation3], %s316
        %s318 = sand.u32 %s63, 1
        %s319 = smul.addr %s318, 8
        %s320 = scalar_lea.vmem [#allocation2], %s319
        %p321 = pneg %p76
        %p322 = pneg %p73
        %p323 = scmp.lt.s32.totalorder %s29, 1
        %s324 = scalar_select %p323, %s29, 1
        %s325 = scalar_lea.vmem %s2, %s324
        %p326 = pneg %p102
        %p327 = pneg %p99
        %p328 = pneg %p123
        %p329 = pneg %p120
        %p330 = pneg %p144
        %p331 = pneg %p141
        %p332 = pneg %p165
        %p333 = pneg %p162
        %p334 = pneg %p191
        %p335 = pneg %p188
        %s336 = sand.u32 %s178, 1
        %s337 = scalar_lea.sflag [#allocation4], %s336
        %s338 = sand.u32 %s178, 1
        %s339 = smul.addr %s338, 8
        %s340 = scalar_lea.vmem [#allocation7], %s339
        %p341 = pneg %p217
        %p342 = pneg %p214
        %s343 = sand.u32 %s204, 1
        %s344 = scalar_lea.sflag [#allocation9], %s343
        %s345 = sand.u32 %s204, 1
        %s346 = smul.addr %s345, 8
        %s347 = scalar_lea.vmem [#allocation8], %s346
        %p348 = scmp.lt.s32.totalorder %s29, 1
        %s349 = scalar_select %p348, %s29, 1
        %s350 = smul.addr %s349, 8
        %s351 = scalar_lea.vmem %s0, %s350
        %p352 = scmp.lt.s32.totalorder %s29, 1
        %s353 = scalar_select %p352, %s29, 1
        %s354 = scalar_lea.vmem %s2, %s353
        %v356 = vld [vmem:[%s299] sm:$0xff]
        %v357 = vld [vmem:[%s351] sm:$0xff]
        %v358 = vld [vmem:[#allocation5] sm:$0xff]
        %v359 = vld [vmem:[#allocation5 + $0x8] sm:$0xff]
        %v360 = vld [vmem:[#allocation5 + $0x10] sm:$0xff]
        %v361 = vld [vmem:[#allocation5 + $0x18] sm:$0xff]
        %vm362 = vcmask 261120
        %v364 = vsel %vm362, %v357, 0
        %366 = vmatpush.msra.mxu0 0.0
        %367 = vmatpush.msra.mxu0 0.0
        %368 = vmatpush.msra.mxu0 0.0
        %369 = vmatpush.msra.mxu0 0.0
        %370 = vmatpush.msra.mxu0 0.0
        %371 = vmatpush.msra.mxu0 0.0
        %372 = vmatpush.msra.mxu0 0.0
        %373 = vmatpush.msra.mxu0 0.0
        %374 = vmatpush.msra.mxu0 0.0
        %375 = vmatpush.msra.mxu0 0.0
        %376 = vmatpush.msra.mxu0 0.0
        %377 = vmatpush.msra.mxu0 0.0
        %378 = vmatpush.msra.mxu0 %v361
        %379 = vmatpush.msra.mxu0 %v360
        %380 = vmatpush.msra.mxu0 %v359
        %381 = vmatpush.msra.mxu0 %v358
        %382 = vmatmul.f32.gmra.mxu0 %v364
        %v383 = vpop.f32.mrf.mxu0
        %v384 = vadd.f32 0.0, %v383
        %385 = vdwg.mxu0
        %v386 = vld [vmem:[%s354] sm:$0x1]
        %v388 = vperm.slane %v386, 0
        %v391 = vsel %vm362, %v384, 0
        %v394 = vsel %vm362, %v356, 0
        %396 = vmatpush.xpose.msra.mxu0 0.0
        %397 = vmatpush.xpose.msra.mxu0 0.0
        %398 = vmatpush.xpose.msra.mxu0 0.0
        %399 = vmatpush.xpose.msra.mxu0 0.0
        %400 = vmatpush.xpose.msra.mxu0 0.0
        %401 = vmatpush.xpose.msra.mxu0 0.0
        %402 = vmatpush.xpose.msra.mxu0 0.0
        %403 = vmatpush.xpose.msra.mxu0 0.0
        %404 = vmatpush.xpose.msra.mxu0 0.0
        %405 = vmatpush.xpose.msra.mxu0 0.0
        %406 = vmatpush.xpose.msra.mxu0 0.0
        %407 = vmatpush.xpose.msra.mxu0 0.0
        %408 = vmatpush.xpose.msra.mxu0 0.0
        %409 = vmatpush.xpose.msra.mxu0 0.0
        %410 = vmatpush.xpose.msra.mxu0 0.0
        %411 = vmatpush.xpose.msra.mxu0 %v394
        %412 = vmatmul.f32.gmra.mxu0 %v391
        %v413 = vpop.f32.mrf.mxu0
        %v414 = vadd.f32 %v388, %v413
        %415 = vdwg.mxu0
        %vm416 = vcmask 64512
        %v417 = vsel %vm416, %v414, -inf
        %418 = vmax.xlane.f32.xlu0 %v417
        %v419 = vpop.xlane.xlu0 %418
        %v420 = vsub.f32 %v414, %v419
        %v421 = vmul.f32 %v420, 1.442695
        %v422 = vpow.pop %v421
        %v423 = vsel %vm416, %v422, 0.0
        %424 = vadd.xlane.f32.xlu0 %v423
        %v425 = vpop.xlane.xlu0 %424
        %v426 = vrcp.pop %v425
        %v427 = vmul.f32 %v425, %v426
        %v428 = vsub.f32 2.0, %v427
        %v429 = vmul.f32 %v426, %v428
        %v430 = vmul.f32 %v422, %v429
        %431 = vst.msk [vmem:[%s340] sm:$0xff] %vm416, %v430
        %v432 = vpack.c.bf16 %v430, %v430
        %v433 = vpack.c.bf16 %v356, %v356
        %v435 = vsel %vm416, %v432, 0
        %vm437 = vcmask 1043456
        %v439 = vsel %vm437, %v433, 0
        %441 = vmatpush.bf16.msra.mxu0 0
        %442 = vmatpush.bf16.msra.mxu0 0
        %443 = vmatpush.bf16.msra.mxu0 0
        %444 = vmatpush.bf16.msra.mxu0 0
        %445 = vmatpush.bf16.msra.mxu0 0
        %446 = vmatpush.bf16.msra.mxu0 0
        %447 = vmatpush.bf16.msra.mxu0 0
        %448 = vmatpush.bf16.msra.mxu0 %v439
        %449 = vmatmul.bf16.gmra.mxu0 %v435
        %v450 = vpop.f32.mrf.mxu0
        %v451 = vadd.f32 0.0, %v450
        %v452 = vpop.f32.mrf.mxu0
        %453 = vdwg.mxu0
        %v454 = vpack.c.bf16 %v451, %v451
        %v455 = vld [vmem:[%s4] sm:$0xf]
        %v456 = vld [vmem:[%s4 + $0x4] sm:$0xf]
        %v457 = vld [vmem:[%s4 + $0x8] sm:$0xf]
        %v458 = vld [vmem:[%s4 + $0xc] sm:$0xf]
        %v459 = vld [vmem:[%s5] sm:$0x1]
        %v461 = vperm.slane %v459, 0
        %v467 = vunpack.c.l.b16 %v455
        %v468 = vunpack.c.l.b16 %v456
        %v469 = vunpack.c.l.b16 %v457
        %v470 = vunpack.c.l.b16 %v458
        %v471 = vpack.c.b16 %v468, %v467
        %v472 = vpack.c.b16 %v470, %v469
        %v476 = vsel %vm362, %v454, 0
        %478 = vmatpush.bf16.msra.mxu0 0
        %479 = vmatpush.bf16.msra.mxu0 0
        %480 = vmatpush.bf16.msra.mxu0 0
        %481 = vmatpush.bf16.msra.mxu0 0
        %482 = vmatpush.bf16.msra.mxu0 0
        %483 = vmatpush.bf16.msra.mxu0 0
        %484 = vmatpush.bf16.msra.mxu0 %v472
        %485 = vmatpush.bf16.msra.mxu0 %v471
        %486 = vmatmul.bf16.gmra.mxu0 %v476
        %v487 = vpop.f32.mrf.mxu0
        %v488 = vadd.f32 %v461, %v487
        %v489 = vpop.f32.mrf.mxu0
        %490 = vdwg.mxu0
        %vm491 = vcmask 130048
        %492 = vst.msk [vmem:[%s347] sm:$0xff] %vm491, %v488
        %s493 = sand.u32 %s178, 1
        %s494 = scalar_lea.sflag [#allocation4], %s493
        %s495 = sand.u32 %s178, 1
        %s496 = smul.addr %s495, 8
        %s497 = scalar_lea.vmem [#allocation7], %s496
        %s498 = sand.u32 %s204, 1
        %s499 = scalar_lea.sflag [#allocation9], %s498
        %s500 = sand.u32 %s204, 1
        %s501 = smul.addr %s500, 8
        %s502 = scalar_lea.vmem [#allocation8], %s501
        // Predicated region
        $region53: #{tpu_custom_call.1} parent=43 // pred_check
          %p503 = pneg %p188
        $region54: #{tpu_custom_call.1} parent=43 // pred_check_branch
          %505 = sbr.rel (%p503) target = $region56
        $region55: #{tpu_custom_call.1} parent=43 // pred_region
          %507 = vsyncadd %s494, 0
          %s508 = smul.addr %s29, 8
          %s509 = scalar_lea.hbm %s6, %s508
          %s511 = sshll.u32 %s497, 4
          %s512 = int_to_ptr.vmem [resolvable:$true] %s511
          %s513 = sshll.u32 %s509, 4
          %s514 = int_to_ptr.hbm [resolvable:$true] %s513
          %516 = dma.vmem_to_hbm [thread:$0]  %s512, 128, %s514, %s494
        $region56: #{tpu_custom_call.1} parent=43 // pred_fallthru
          _
        // Predicated region
        $region57: #{tpu_custom_call.1} parent=43 // pred_check
          %p517 = pneg %p214
        $region58: #{tpu_custom_call.1} parent=43 // pred_check_branch
          %519 = sbr.rel (%p517) target = $region60
        $region59: #{tpu_custom_call.1} parent=43 // pred_region
          %521 = vsyncadd %s499, 0
          %s522 = smul.addr %s29, 8
          %s523 = scalar_lea.hbm %s7, %s522
          %s525 = sshll.u32 %s502, 4
          %s526 = int_to_ptr.vmem [resolvable:$true] %s525
          %s527 = sshll.u32 %s523, 4
          %s528 = int_to_ptr.hbm [resolvable:$true] %s527
          %530 = dma.vmem_to_hbm [thread:$0]  %s526, 128, %s528, %s499
        $region60: #{tpu_custom_call.1} parent=43 // pred_fallthru
          _
      $region44: #{tpu_custom_call.1} parent=5 // pred_fallthru
        _
      %p531 = scmp.le.s32.totalorder 2, %s24
      // Predicated region
      $region61: #{tpu_custom_call.1} parent=5 // pred_check
        %p532 = pneg %p531
      $region62: #{tpu_custom_call.1} parent=5 // pred_check_branch
        %534 = sbr.rel (%p532) target = $region64
      $region63: #{tpu_custom_call.1} parent=5 // pred_region
        %s535 = ssub.s32 %s24, 2
        // Predicated region
        $region65: #{tpu_custom_call.1} parent=63 // pred_check
          %p536 = pneg %p194
        $region66: #{tpu_custom_call.1} parent=63 // pred_check_branch
          %538 = sbr.rel (%p536) target = $region68
        $region67: #{tpu_custom_call.1} parent=63 // pred_region
          %s539 = sand.u32 %s179, 1
          %s540 = scalar_lea.sflag [#allocation4], %s539
          %s541 = sand.u32 %s179, 1
          %s542 = smul.addr %s541, 8
          %s543 = scalar_lea.vmem [#allocation7], %s542
          %545 = dma.done %s540, 128
        $region68: #{tpu_custom_call.1} parent=63 // pred_fallthru
          _
        // Predicated region
        $region69: #{tpu_custom_call.1} parent=63 // pred_check
          %p546 = pneg %p220
        $region70: #{tpu_custom_call.1} parent=63 // pred_check_branch
          %548 = sbr.rel (%p546) target = $region72
        $region71: #{tpu_custom_call.1} parent=63 // pred_region
          %s549 = sand.u32 %s205, 1
          %s550 = scalar_lea.sflag [#allocation9], %s549
          %s551 = sand.u32 %s205, 1
          %s552 = smul.addr %s551, 8
          %s553 = scalar_lea.vmem [#allocation8], %s552
          %555 = dma.done %s550, 128
        $region72: #{tpu_custom_call.1} parent=63 // pred_fallthru
          _
      $region64: #{tpu_custom_call.1} parent=5 // pred_fallthru
        _
    $region6: #{tpu_custom_call.1} parent=1 // loop_footer
      %s28 = sadd.s32 1, %s24
    $region7: #{tpu_custom_call.1} parent=1 // loop_footer_branch
      %23 = sbr.rel target = $region3
    $region8: #{tpu_custom_call.1} parent=1 // loop_exit
      _
    %556 = vsyncpa [#allocation3], 1
    %s557 = scalar_lea.sflag [#allocation3], 1
    %558 = vsyncpa %s557, 1
    %559 = vsyncpa [#allocation6], 1
    %560 = vsyncpa [#allocation4], 1
    %s561 = scalar_lea.sflag [#allocation4], 1
    %562 = vsyncpa %s561, 1
    %563 = vsyncpa [#allocation9], 1
    %s564 = scalar_lea.sflag [#allocation9], 1
    %565 = vsyncpa %s564, 1

</llo_original>
